<compile_context>
chip_gen: v6e
topology: v6e:2x2x1
jax: 0.10.0
libtpu: 0.0.40
codegen_flags: <defaults>
</compile_context>

<pallas_src>
import functools

import jax
import jax.numpy as jnp
from jax.experimental import pallas as pl
from jax.experimental.pallas import tpu as pltpu


def _round_up(n, m):
    return ((n + m - 1) // m) * m


def _vmem_capacity_bytes():
    """Trace-time VMEM capacity query; conservative fallback if unavailable."""
    try:
        return int(pltpu.get_tpu_info().vmem_capacity_bytes)
    except Exception:
        return 64 * 1024 * 1024  # v7x-class worst case


# ----------------------------------------------------------------------------
# Kernel
# ----------------------------------------------------------------------------
def _mlp_unet_kernel(num_layers, *refs):
    """refs = (x_ref, w0, b0, w1, b1, ..., wL, bL, y_ref, o_ref).

    Layout: pixels on lanes, channels on sublanes.
      x_ref : (C_in,  tile_p)      y_ref/o_ref : (C_out, tile_p)
      w_l   : (c_out_l, c_in_l) bf16   b_l     : (c_out_l, 1) f32
    """
    x_ref = refs[0]
    y_ref = refs[1 + 2 * num_layers]
    o_ref = refs[2 + 2 * num_layers]

    h = x_ref[...].astype(jnp.float32)                 # (C_in, tile_p) f32
    for l in range(num_layers):
        w = refs[1 + 2 * l][...]                       # (c_out_l, c_in_l) bf16
        b = refs[2 + 2 * l][...]                       # (c_out_l, 1)      f32
        # bf16 MXU operands, f32 accumulate.
        h = jnp.dot(w, h.astype(jnp.bfloat16),
                    preferred_element_type=jnp.float32) + b
        if l < num_layers - 1:                         # hidden blocks: relu
            h = jnp.maximum(h, 0.0)
    # last block has no norm / no non-linearity, then tanh + residual y.
    # jnp.tanh -> lax.tanh -> single EUP transcendental (own bundle slot).
    o_ref[...] = (jnp.tanh(h) + y_ref[...].astype(jnp.float32)).astype(o_ref.dtype)


# ----------------------------------------------------------------------------
# Wrapper
# ----------------------------------------------------------------------------
def netG_mlp_unet_forward(x_nchw, y_nchw, weights, biases, *, tile_p_max=None):
    """x_nchw: (B, c_in, H, W); y_nchw: (B, c_out, H, W).

    weights[l]: (c_out_l, c_in_l)   (PyTorch 1x1-conv layout, used as W @ h)
    biases[l]:  (c_out_l, 1)
    """
    B, C_in, H, W = x_nchw.shape
    C_out = weights[-1].shape[0]
    num_layers = len(weights)
    HW = H * W

    # NCHW is already channels-first / pixels-last -> zero-copy reshape.
    # Keep the caller's dtype at the HBM boundary (no extra astype pass).
    x3 = x_nchw.reshape(B, C_in, HW)
    y3 = y_nchw.reshape(B, C_out, HW)
    out_dtype = y_nchw.dtype

    # bf16 weights for the MXU; f32 biases for the f32 epilogue.
    w_bf16 = [w.astype(jnp.bfloat16) for w in weights]
    b_f32 = [b.astype(jnp.float32) for b in biases]

    # ---- generation-aware tile sizing -------------------------------------
    vmem_cap = _vmem_capacity_bytes()
    big_vmem = vmem_cap >= 128 * 1024 * 1024          # v5e / v6e
    if tile_p_max is None:
        tile_p_max = 131072 if big_vmem else 32768    # review-recommended caps
    tile_p_max = max(128, (int(tile_p_max) // 128) * 128)  # enforce lane align
    vmem_limit = (96 if big_vmem else 48) * 1024 * 1024
    block_budget = int(vmem_limit * 0.75)

    max_c = max([C_in, C_out] + [int(w.shape[0]) for w in weights])
    xb = x3.dtype.itemsize
    yb = y3.dtype.itemsize
    ob = jnp.dtype(out_dtype).itemsize
    # double-buffered IO blocks + a few live f32/bf16 (max_c, tile_p) intermediates
    per_px = 2 * C_in * xb + 2 * C_out * yb + 2 * C_out * ob + 3 * 4 * max_c

    tile_p = min(tile_p_max,
                 _round_up(HW, 128),
                 max(128, (block_budget // per_px // 128) * 128))
    grid_p = pl.cdiv(HW, tile_p)

    # v7x has 2 TensorCores: keep >=2 parallel grid steps when possible.
    while B * grid_p < 2 and tile_p > 128:
        tile_p = max(128, ((tile_p // 2) // 128) * 128)
        grid_p = pl.cdiv(HW, tile_p)

    grid = (B, grid_p)

    # Pixel-tile BlockSpecs (leading batch dim squeezed). Ragged last pixel
    # block is handled by Pallas partial-block clipping (no jnp.pad / slice).
    x_spec = pl.BlockSpec((None, C_in, tile_p), lambda b, p: (b, 0, p))
    y_spec = pl.BlockSpec((None, C_out, tile_p), lambda b, p: (b, 0, p))
    o_spec = pl.BlockSpec((None, C_out, tile_p), lambda b, p: (b, 0, p))

    param_specs = []
    for w, b in zip(w_bf16, b_f32):
        param_specs.append(pl.BlockSpec(w.shape, lambda bi, pi: (0, 0)))
        param_specs.append(pl.BlockSpec(b.shape, lambda bi, pi: (0, 0)))

    kernel = functools.partial(_mlp_unet_kernel, num_layers)

    # Truthful scheduler hint: tiny flops, HBM-bandwidth-bound.
    M = B * HW
    flops = 2 * M * sum(int(w.shape[0]) * int(w.shape[1]) for w in weights)
    param_bytes = sum(w.size * w.dtype.itemsize + b.size * b.dtype.itemsize
                      for w, b in zip(w_bf16, b_f32))
    cost = pl.CostEstimate(
        flops=flops,
        transcendentals=M * C_out,
        bytes_accessed=M * (C_in * xb + C_out * yb + C_out * ob) + param_bytes,
    )

    out3 = pl.pallas_call(
        kernel,
        out_shape=jax.ShapeDtypeStruct((B, C_out, HW), out_dtype),
        grid=grid,
        in_specs=[x_spec] + param_specs + [y_spec],
        out_specs=o_spec,
        compiler_params=pltpu.CompilerParams(
            dimension_semantics=("parallel", "parallel"),
            vmem_limit_bytes=vmem_limit,
        ),
        cost_estimate=cost,
    )(x3, *[t for wb in zip(w_bf16, b_f32) for t in wb], y3)

    return out3.reshape(B, C_out, H, W)


# ----------------------------------------------------------------------------
# Deterministic parameter construction (matches __init__ shapes)
# ----------------------------------------------------------------------------
def build_params(key, c_in, n_features, c_out):
    weights, biases = [], []
    c = c_in
    for c_next in n_features:
        key, kw, kb = jax.random.split(key, 3)
        w = jax.random.normal(kw, (c_next, c), jnp.float32) * (1.0 / jnp.sqrt(c))
        b = jax.random.normal(kb, (c_next,), jnp.float32) * 0.01
        weights.append(w)                      # (c_out_l, c_in_l)
        biases.append(b.reshape(c_next, 1))    # (c_out_l, 1)
        c = c_next
    # last_conv declared with (c + 3) input channels in __init__;
    # forward only ever supplies c channels -> use first c columns.
    key, kw, kb = jax.random.split(key, 3)
    w_last_full = jax.random.normal(kw, (c_out, c + 3), jnp.float32) * (1.0 / jnp.sqrt(c + 3))
    b_last = jax.random.normal(kb, (c_out,), jnp.float32) * 0.01
    weights.append(w_last_full[:, :c])         # (c_out, c)
    biases.append(b_last.reshape(c_out, 1))
    return weights, biases


# ----------------------------------------------------------------------------
# Pure-JAX reference (same bf16-operand / f32-accumulate numerics) for check
# ----------------------------------------------------------------------------
def reference_forward(x_nchw, y_nchw, weights, biases):
    B, C_in, H, W = x_nchw.shape
    C_out = weights[-1].shape[0]
    h = x_nchw.reshape(B, C_in, H * W).astype(jnp.float32)
    for l, (w, b) in enumerate(zip(weights, biases)):
        h = jnp.einsum('oc,bcp->bop',
                       w.astype(jnp.bfloat16), h.astype(jnp.bfloat16),
                       preferred_element_type=jnp.float32)
        h = h + b.astype(jnp.float32)[None, :, :]
        if l < len(weights) - 1:
            h = jnp.maximum(h, 0.0)
    h = jnp.tanh(h)
    out = h + y_nchw.reshape(B, C_out, H * W).astype(jnp.float32)
    return out.reshape(B, C_out, H, W).astype(y_nchw.dtype)


if __name__ == "__main__":
    # small shapes consistent with the module
    B, C_IN, H, W = 2, 4, 16, 16
    N_FEATURES = [32, 32, 32]
    C_OUT = 3

    key = jax.random.PRNGKey(0)
    key, kx, ky = jax.random.split(key, 3)
    x = jax.random.normal(kx, (B, C_IN, H, W), jnp.float32)
    y = jax.random.normal(ky, (B, C_OUT, H, W), jnp.float32)

    weights, biases = build_params(key, C_IN, N_FEATURES, C_OUT)

    out = netG_mlp_unet_forward(x, y, weights, biases)
    out = jax.block_until_ready(out)

    ref = reference_forward(x, y, weights, biases)
    assert out.shape == (B, C_OUT, H, W)
    assert jnp.allclose(out, ref, atol=2e-3, rtol=2e-3), "mismatch vs reference"

    print("KERNEL_OK")
</pallas_src>

<mosaic_0001>
module attributes {stable_mosaic.version = 11 : i64} {
  func.func @_mlp_unet_kernel(%arg0: i32, %arg1: i32, %arg2: memref<1x4x256xf32, #tpu.memory_space<vmem>>, %arg3: memref<32x4xbf16, #tpu.memory_space<vmem>>, %arg4: memref<32x1xf32, #tpu.memory_space<vmem>>, %arg5: memref<32x32xbf16, #tpu.memory_space<vmem>>, %arg6: memref<32x1xf32, #tpu.memory_space<vmem>>, %arg7: memref<32x32xbf16, #tpu.memory_space<vmem>>, %arg8: memref<32x1xf32, #tpu.memory_space<vmem>>, %arg9: memref<3x32xbf16, #tpu.memory_space<vmem>>, %arg10: memref<3x1xf32, #tpu.memory_space<vmem>>, %arg11: memref<1x3x256xf32, #tpu.memory_space<vmem>>, %arg12: memref<1x3x256xf32, #tpu.memory_space<vmem>>) attributes {dimension_semantics = [#tpu.dimension_semantics<parallel>, #tpu.dimension_semantics<parallel>], iteration_bounds = array<i64: 2, 1>, scalar_prefetch = 0 : i64, scratch_operands = 0 : i64, tpu.core_type = #tpu.core_type<tc>, window_params = [{transform_indices = @transform_0, window_bounds = array<i64: 1, 4, 256>}, {pipeline_mode = #tpu.pipeline_mode<synchronous>, transform_indices = @transform_1, window_bounds = array<i64: 32, 4>}, {pipeline_mode = #tpu.pipeline_mode<synchronous>, transform_indices = @transform_2, window_bounds = array<i64: 32, 1>}, {pipeline_mode = #tpu.pipeline_mode<synchronous>, transform_indices = @transform_3, window_bounds = array<i64: 32, 32>}, {pipeline_mode = #tpu.pipeline_mode<synchronous>, transform_indices = @transform_4, window_bounds = array<i64: 32, 1>}, {pipeline_mode = #tpu.pipeline_mode<synchronous>, transform_indices = @transform_5, window_bounds = array<i64: 32, 32>}, {pipeline_mode = #tpu.pipeline_mode<synchronous>, transform_indices = @transform_6, window_bounds = array<i64: 32, 1>}, {pipeline_mode = #tpu.pipeline_mode<synchronous>, transform_indices = @transform_7, window_bounds = array<i64: 3, 32>}, {pipeline_mode = #tpu.pipeline_mode<synchronous>, transform_indices = @transform_8, window_bounds = array<i64: 3, 1>}, {transform_indices = @transform_9, window_bounds = array<i64: 1, 3, 256>}, {transform_indices = @transform_10, window_bounds = array<i64: 1, 3, 256>}]} {
    %c0 = arith.constant 0 : index
    %c0_0 = arith.constant 0 : index
    %c0_1 = arith.constant 0 : index
    %0 = vector.load %arg2[%c0, %c0_0, %c0_1] : memref<1x4x256xf32, #tpu.memory_space<vmem>>, vector<1x4x256xf32>
    %1 = vector.shape_cast %0 : vector<1x4x256xf32> to vector<4x256xf32>
    %c0_2 = arith.constant 0 : index
    %c0_3 = arith.constant 0 : index
    %2 = vector.load %arg3[%c0_2, %c0_3] : memref<32x4xbf16, #tpu.memory_space<vmem>>, vector<32x4xbf16>
    %c0_4 = arith.constant 0 : index
    %c0_5 = arith.constant 0 : index
    %3 = vector.load %arg4[%c0_4, %c0_5] : memref<32x1xf32, #tpu.memory_space<vmem>>, vector<32x1xf32>
    %4 = arith.truncf %1 : vector<4x256xf32> to vector<4x256xbf16>
    %cst = arith.constant dense<0.000000e+00> : vector<32x256xf32>
    %5 = tpu.matmul %2, %4, %cst {dimension_numbers = #tpu.dot_dimension_numbers<[1], [0], [0], [1], [0, 0, 1, 1], [], []>} : vector<32x4xbf16>, vector<4x256xbf16>, vector<32x256xf32> -> vector<32x256xf32>
    %6 = vector.broadcast %3 : vector<32x1xf32> to vector<32x256xf32>
    %7 = arith.addf %5, %6 : vector<32x256xf32>
    %cst_6 = arith.constant 0.000000e+00 : f32
    %8 = vector.broadcast %cst_6 : f32 to vector<32x256xf32>
    %9 = arith.maximumf %7, %8 : vector<32x256xf32>
    %c0_7 = arith.constant 0 : index
    %c0_8 = arith.constant 0 : index
    %10 = vector.load %arg5[%c0_7, %c0_8] : memref<32x32xbf16, #tpu.memory_space<vmem>>, vector<32x32xbf16>
    %c0_9 = arith.constant 0 : index
    %c0_10 = arith.constant 0 : index
    %11 = vector.load %arg6[%c0_9, %c0_10] : memref<32x1xf32, #tpu.memory_space<vmem>>, vector<32x1xf32>
    %12 = arith.truncf %9 : vector<32x256xf32> to vector<32x256xbf16>
    %cst_11 = arith.constant dense<0.000000e+00> : vector<32x256xf32>
    %13 = tpu.matmul %10, %12, %cst_11 {dimension_numbers = #tpu.dot_dimension_numbers<[1], [0], [0], [1], [0, 0, 1, 1], [], []>} : vector<32x32xbf16>, vector<32x256xbf16>, vector<32x256xf32> -> vector<32x256xf32>
    %14 = vector.broadcast %11 : vector<32x1xf32> to vector<32x256xf32>
    %15 = arith.addf %13, %14 : vector<32x256xf32>
    %cst_12 = arith.constant 0.000000e+00 : f32
    %16 = vector.broadcast %cst_12 : f32 to vector<32x256xf32>
    %17 = arith.maximumf %15, %16 : vector<32x256xf32>
    %c0_13 = arith.constant 0 : index
    %c0_14 = arith.constant 0 : index
    %18 = vector.load %arg7[%c0_13, %c0_14] : memref<32x32xbf16, #tpu.memory_space<vmem>>, vector<32x32xbf16>
    %c0_15 = arith.constant 0 : index
    %c0_16 = arith.constant 0 : index
    %19 = vector.load %arg8[%c0_15, %c0_16] : memref<32x1xf32, #tpu.memory_space<vmem>>, vector<32x1xf32>
    %20 = arith.truncf %17 : vector<32x256xf32> to vector<32x256xbf16>
    %cst_17 = arith.constant dense<0.000000e+00> : vector<32x256xf32>
    %21 = tpu.matmul %18, %20, %cst_17 {dimension_numbers = #tpu.dot_dimension_numbers<[1], [0], [0], [1], [0, 0, 1, 1], [], []>} : vector<32x32xbf16>, vector<32x256xbf16>, vector<32x256xf32> -> vector<32x256xf32>
    %22 = vector.broadcast %19 : vector<32x1xf32> to vector<32x256xf32>
    %23 = arith.addf %21, %22 : vector<32x256xf32>
    %cst_18 = arith.constant 0.000000e+00 : f32
    %24 = vector.broadcast %cst_18 : f32 to vector<32x256xf32>
    %25 = arith.maximumf %23, %24 : vector<32x256xf32>
    %c0_19 = arith.constant 0 : index
    %c0_20 = arith.constant 0 : index
    %26 = vector.load %arg9[%c0_19, %c0_20] : memref<3x32xbf16, #tpu.memory_space<vmem>>, vector<3x32xbf16>
    %c0_21 = arith.constant 0 : index
    %c0_22 = arith.constant 0 : index
    %27 = vector.load %arg10[%c0_21, %c0_22] : memref<3x1xf32, #tpu.memory_space<vmem>>, vector<3x1xf32>
    %28 = arith.truncf %25 : vector<32x256xf32> to vector<32x256xbf16>
    %cst_23 = arith.constant dense<0.000000e+00> : vector<3x256xf32>
    %29 = tpu.matmul %26, %28, %cst_23 {dimension_numbers = #tpu.dot_dimension_numbers<[1], [0], [0], [1], [0, 0, 1, 1], [], []>} : vector<3x32xbf16>, vector<32x256xbf16>, vector<3x256xf32> -> vector<3x256xf32>
    %30 = vector.broadcast %27 : vector<3x1xf32> to vector<3x256xf32>
    %31 = arith.addf %29, %30 : vector<3x256xf32>
    %32 = math.tanh %31 : vector<3x256xf32>
    %c0_24 = arith.constant 0 : index
    %c0_25 = arith.constant 0 : index
    %c0_26 = arith.constant 0 : index
    %33 = vector.load %arg11[%c0_24, %c0_25, %c0_26] : memref<1x3x256xf32, #tpu.memory_space<vmem>>, vector<1x3x256xf32>
    %34 = vector.shape_cast %33 : vector<1x3x256xf32> to vector<3x256xf32>
    %35 = arith.addf %32, %34 : vector<3x256xf32>
    %c0_27 = arith.constant 0 : index
    %c0_28 = arith.constant 0 : index
    %c0_29 = arith.constant 0 : index
    %36 = vector.load %arg12[%c0_27, %c0_28, %c0_29] : memref<1x3x256xf32, #tpu.memory_space<vmem>>, vector<1x3x256xf32>
    %37 = vector.shape_cast %36 : vector<1x3x256xf32> to vector<3x256xf32>
    %38 = vector.shape_cast %35 : vector<3x256xf32> to vector<1x3x256xf32>
    tpu.vector_store %arg12[%c0_27, %c0_28, %c0_29], %38 {strides = array<i32>} : memref<1x3x256xf32, #tpu.memory_space<vmem>>, vector<1x3x256xf32>,
    return
  }
  func.func @transform_0(%arg0: i32, %arg1: i32) -> (i32, i32, i32) {
    %c0_i32 = arith.constant 0 : i32
    %c0_i32_0 = arith.constant 0 : i32
    return %arg0, %c0_i32, %arg1 : i32, i32, i32
  }
  func.func @transform_1(%arg0: i32, %arg1: i32) -> (i32, i32) {
    %c0_i32 = arith.constant 0 : i32
    %c0_i32_0 = arith.constant 0 : i32
    %c0_i32_1 = arith.constant 0 : i32
    return %c0_i32, %c0_i32_0 : i32, i32
  }
  func.func @transform_2(%arg0: i32, %arg1: i32) -> (i32, i32) {
    %c0_i32 = arith.constant 0 : i32
    %c0_i32_0 = arith.constant 0 : i32
    %c0_i32_1 = arith.constant 0 : i32
    return %c0_i32, %c0_i32_0 : i32, i32
  }
  func.func @transform_3(%arg0: i32, %arg1: i32) -> (i32, i32) {
    %c0_i32 = arith.constant 0 : i32
    %c0_i32_0 = arith.constant 0 : i32
    %c0_i32_1 = arith.constant 0 : i32
    return %c0_i32, %c0_i32_0 : i32, i32
  }
  func.func @transform_4(%arg0: i32, %arg1: i32) -> (i32, i32) {
    %c0_i32 = arith.constant 0 : i32
    %c0_i32_0 = arith.constant 0 : i32
    %c0_i32_1 = arith.constant 0 : i32
    return %c0_i32, %c0_i32_0 : i32, i32
  }
  func.func @transform_5(%arg0: i32, %arg1: i32) -> (i32, i32) {
    %c0_i32 = arith.constant 0 : i32
    %c0_i32_0 = arith.constant 0 : i32
    %c0_i32_1 = arith.constant 0 : i32
    return %c0_i32, %c0_i32_0 : i32, i32
  }
  func.func @transform_6(%arg0: i32, %arg1: i32) -> (i32, i32) {
    %c0_i32 = arith.constant 0 : i32
    %c0_i32_0 = arith.constant 0 : i32
    %c0_i32_1 = arith.constant 0 : i32
    return %c0_i32, %c0_i32_0 : i32, i32
  }
  func.func @transform_7(%arg0: i32, %arg1: i32) -> (i32, i32) {
    %c0_i32 = arith.constant 0 : i32
    %c0_i32_0 = arith.constant 0 : i32
    %c0_i32_1 = arith.constant 0 : i32
    return %c0_i32, %c0_i32_0 : i32, i32
  }
  func.func @transform_8(%arg0: i32, %arg1: i32) -> (i32, i32) {
    %c0_i32 = arith.constant 0 : i32
    %c0_i32_0 = arith.constant 0 : i32
    %c0_i32_1 = arith.constant 0 : i32
    return %c0_i32, %c0_i32_0 : i32, i32
  }
  func.func @transform_9(%arg0: i32, %arg1: i32) -> (i32, i32, i32) {
    %c0_i32 = arith.constant 0 : i32
    %c0_i32_0 = arith.constant 0 : i32
    return %arg0, %c0_i32, %arg1 : i32, i32, i32
  }
  func.func @transform_10(%arg0: i32, %arg1: i32) -> (i32, i32, i32) {
    %c0_i32 = arith.constant 0 : i32
    %c0_i32_0 = arith.constant 0 : i32
    return %arg0, %c0_i32, %arg1 : i32, i32, i32
  }
}

</mosaic_0001>

<llo_original>
// kernel: tpu_custom_call.1
$region0: #{tpu_custom_call.1}
  #allocation0 [shape = 'u32[]', space=smem, size = 0x4, offset = 0x4, fixed_abs, tag = 'smem constant byte address 0x4 - core index']
  #allocation1 [shape = 'u32[144,128]{1,0:T(1,128)}', space=vmem, size = 0x12000, scoped, tag = 'internal scratch']
  %s0 = inlined_call_operand.vmem [shape: f32[2,4,256], index: 0, kind: input, shape index: {}]
  %s1 = inlined_call_operand.vmem [shape: bf16[32,4], index: 1, kind: input, shape index: {}]
  %s2 = inlined_call_operand.vmem [shape: f32[32,1], index: 2, kind: input, shape index: {}]
  %s3 = inlined_call_operand.vmem [shape: bf16[32,32], index: 3, kind: input, shape index: {}]
  %s4 = inlined_call_operand.vmem [shape: f32[32,1], index: 4, kind: input, shape index: {}]
  %s5 = inlined_call_operand.vmem [shape: bf16[32,32], index: 5, kind: input, shape index: {}]
  %s6 = inlined_call_operand.vmem [shape: f32[32,1], index: 6, kind: input, shape index: {}]
  %s7 = inlined_call_operand.vmem [shape: bf16[3,32], index: 7, kind: input, shape index: {}]
  %s8 = inlined_call_operand.vmem [shape: f32[3,1], index: 8, kind: input, shape index: {}]
  %s9 = inlined_call_operand.vmem [shape: f32[2,3,256], index: 9, kind: input, shape index: {}]
  %s10 = inlined_call_operand.vmem [shape: f32[2,3,256], index: 10, kind: output, shape index: {}]
  %s11 = sld [smem:[#allocation0]]
  $region73: #{tpu_custom_call.1} parent=0
    _
  %s13 = ssub.s32 1, %s11
  %s14 = scalar_select 0, %s13, %s11
  loop: start=0, step=1, limit=4
  $region2: #{tpu_custom_call.1} parent=0 // loop_pre_header
    _
  $region3: #{tpu_custom_call.1} parent=0 // loop_header
    %s16 = sphi 0, %s20
    %p17 = scmp.ge.s32.totalorder %s16, 4
    %s23 = sphi 0, %s35
    %s24 = sphi 0, %s31
    %s25 = sphi 0, %s23
    %s26 = sphi 0, %s24
    %s27 = sphi 0, %s25
    %s28 = sphi 0, %s26
    %s40 = sphi 0, %s42
    %s43 = sphi 0, %s40
    %s44 = sphi 0, %s43
    %s60 = sphi 0, %s44
    %s64 = sphi 0, %s64
    %s66 = sphi 0, %s64
    %s67 = sphi 0, %s66
    %s81 = sphi 0, %s67
    %s85 = sphi 0, %s85
    %s87 = sphi 0, %s85
    %s88 = sphi 0, %s87
    %s102 = sphi 0, %s88
    %s106 = sphi 0, %s106
    %s108 = sphi 0, %s106
    %s109 = sphi 0, %s108
    %s123 = sphi 0, %s109
    %s127 = sphi 0, %s127
    %s129 = sphi 0, %s127
    %s130 = sphi 0, %s129
    %s144 = sphi 0, %s130
    %s148 = sphi 0, %s148
    %s150 = sphi 0, %s148
    %s151 = sphi 0, %s150
    %s165 = sphi 0, %s151
    %s169 = sphi 0, %s169
    %s171 = sphi 0, %s169
    %s172 = sphi 0, %s171
    %s186 = sphi 0, %s172
    %s190 = sphi 0, %s190
    %s192 = sphi 0, %s190
    %s193 = sphi 0, %s192
    %s207 = sphi 0, %s193
    %s211 = sphi 0, %s211
    %s213 = sphi 0, %s211
    %s214 = sphi 0, %s213
    %s228 = sphi 0, %s214
    %s236 = sphi 0, %s238
    %s239 = sphi 0, %s236
    %s240 = sphi 0, %s239
    %s256 = sphi 0, %s240
    %s264 = sphi 0, %s266
    %s267 = sphi 0, %s264
    %s268 = sphi 0, %s267
    %s284 = sphi 0, %s268
  $region4: #{tpu_custom_call.1} parent=0 // loop_header_branch
    %19 = sbr.rel (%p17) target = $region8
  $region5: #{tpu_custom_call.1} parent=0 // loop_body
    %s21 = ssub.s32 %s16, 1
    %s22 = ssub.s32 %s16, 2
    %s29 = sadd.s32 1, %s24
    %p30 = scmp.ge.s32.totalorder %s29, 1
    %s31 = scalar_select %p30, 0, %s29
    %s32 = sadd.s32 1, %s23
    %s33 = scalar_select %p30, %s32, %s23
    %p34 = scmp.ge.s32.totalorder %s33, 2
    %s35 = scalar_select %p34, 0, %s33
    %s36 = ssub.s32 %s23, %s35
    %s37 = ssub.s32 %s24, %s31
    %s38 = sor.u32 %s36, %s37
    %p39 = scmp.eq.s32.totalorder %s38, 0
    %s41 = sadd.s32 %s40, 1
    %s42 = scalar_select %p39, %s40, %s41
    %p45 = pneg %p39
    %p46 = scmp.eq.s32.totalorder %s16, 1
    %p47 = por %p45, %p46
    %p48 = scmp.ne.s32.totalorder %s40, %s43
    %p49 = scmp.eq.s32.totalorder %s16, 0
    %p50 = por %p48, %p49
    %p51 = scmp.ne.s32.totalorder %s40, %s43
    %p52 = scmp.eq.s32.totalorder %s21, 1
    %p53 = por %p51, %p52
    %p54 = scmp.ne.s32.totalorder %s43, %s44
    %p55 = scmp.eq.s32.totalorder %s21, 0
    %p56 = por %p54, %p55
    %p57 = scmp.ne.s32.totalorder %s43, %s44
    %p58 = scmp.eq.s32.totalorder %s22, 1
    %p59 = por %p57, %p58
    %p61 = scmp.ne.s32.totalorder %s44, %s60
    %p62 = scmp.eq.s32.totalorder %s22, 0
    %p63 = por %p61, %p62
    %s65 = sadd.s32 %s64, 1
    %p68 = scmp.eq.s32.totalorder %s16, 1
    %p69 = scmp.ne.s32.totalorder %s64, %s66
    %p70 = scmp.eq.s32.totalorder %s16, 0
    %p71 = por %p69, %p70
    %p72 = scmp.ne.s32.totalorder %s64, %s66
    %p73 = scmp.eq.s32.totalorder %s21, 1
    %p74 = por %p72, %p73
    %p75 = scmp.ne.s32.totalorder %s66, %s67
    %p76 = scmp.eq.s32.totalorder %s21, 0
    %p77 = por %p75, %p76
    %p78 = scmp.ne.s32.totalorder %s66, %s67
    %p79 = scmp.eq.s32.totalorder %s22, 1
    %p80 = por %p78, %p79
    %p82 = scmp.ne.s32.totalorder %s67, %s81
    %p83 = scmp.eq.s32.totalorder %s22, 0
    %p84 = por %p82, %p83
    %s86 = sadd.s32 %s85, 1
    %p89 = scmp.eq.s32.totalorder %s16, 1
    %p90 = scmp.ne.s32.totalorder %s85, %s87
    %p91 = scmp.eq.s32.totalorder %s16, 0
    %p92 = por %p90, %p91
    %p93 = scmp.ne.s32.totalorder %s85, %s87
    %p94 = scmp.eq.s32.totalorder %s21, 1
    %p95 = por %p93, %p94
    %p96 = scmp.ne.s32.totalorder %s87, %s88
    %p97 = scmp.eq.s32.totalorder %s21, 0
    %p98 = por %p96, %p97
    %p99 = scmp.ne.s32.totalorder %s87, %s88
    %p100 = scmp.eq.s32.totalorder %s22, 1
    %p101 = por %p99, %p100
    %p103 = scmp.ne.s32.totalorder %s88, %s102
    %p104 = scmp.eq.s32.totalorder %s22, 0
    %p105 = por %p103, %p104
    %s107 = sadd.s32 %s106, 1
    %p110 = scmp.eq.s32.totalorder %s16, 1
    %p111 = scmp.ne.s32.totalorder %s106, %s108
    %p112 = scmp.eq.s32.totalorder %s16, 0
    %p113 = por %p111, %p112
    %p114 = scmp.ne.s32.totalorder %s106, %s108
    %p115 = scmp.eq.s32.totalorder %s21, 1
    %p116 = por %p114, %p115
    %p117 = scmp.ne.s32.totalorder %s108, %s109
    %p118 = scmp.eq.s32.totalorder %s21, 0
    %p119 = por %p117, %p118
    %p120 = scmp.ne.s32.totalorder %s108, %s109
    %p121 = scmp.eq.s32.totalorder %s22, 1
    %p122 = por %p120, %p121
    %p124 = scmp.ne.s32.totalorder %s109, %s123
    %p125 = scmp.eq.s32.totalorder %s22, 0
    %p126 = por %p124, %p125
    %s128 = sadd.s32 %s127, 1
    %p131 = scmp.eq.s32.totalorder %s16, 1
    %p132 = scmp.ne.s32.totalorder %s127, %s129
    %p133 = scmp.eq.s32.totalorder %s16, 0
    %p134 = por %p132, %p133
    %p135 = scmp.ne.s32.totalorder %s127, %s129
    %p136 = scmp.eq.s32.totalorder %s21, 1
    %p137 = por %p135, %p136
    %p138 = scmp.ne.s32.totalorder %s129, %s130
    %p139 = scmp.eq.s32.totalorder %s21, 0
    %p140 = por %p138, %p139
    %p141 = scmp.ne.s32.totalorder %s129, %s130
    %p142 = scmp.eq.s32.totalorder %s22, 1
    %p143 = por %p141, %p142
    %p145 = scmp.ne.s32.totalorder %s130, %s144
    %p146 = scmp.eq.s32.totalorder %s22, 0
    %p147 = por %p145, %p146
    %s149 = sadd.s32 %s148, 1
    %p152 = scmp.eq.s32.totalorder %s16, 1
    %p153 = scmp.ne.s32.totalorder %s148, %s150
    %p154 = scmp.eq.s32.totalorder %s16, 0
    %p155 = por %p153, %p154
    %p156 = scmp.ne.s32.totalorder %s148, %s150
    %p157 = scmp.eq.s32.totalorder %s21, 1
    %p158 = por %p156, %p157
    %p159 = scmp.ne.s32.totalorder %s150, %s151
    %p160 = scmp.eq.s32.totalorder %s21, 0
    %p161 = por %p159, %p160
    %p162 = scmp.ne.s32.totalorder %s150, %s151
    %p163 = scmp.eq.s32.totalorder %s22, 1
    %p164 = por %p162, %p163
    %p166 = scmp.ne.s32.totalorder %s151, %s165
    %p167 = scmp.eq.s32.totalorder %s22, 0
    %p168 = por %p166, %p167
    %s170 = sadd.s32 %s169, 1
    %p173 = scmp.eq.s32.totalorder %s16, 1
    %p174 = scmp.ne.s32.totalorder %s169, %s171
    %p175 = scmp.eq.s32.totalorder %s16, 0
    %p176 = por %p174, %p175
    %p177 = scmp.ne.s32.totalorder %s169, %s171
    %p178 = scmp.eq.s32.totalorder %s21, 1
    %p179 = por %p177, %p178
    %p180 = scmp.ne.s32.totalorder %s171, %s172
    %p181 = scmp.eq.s32.totalorder %s21, 0
    %p182 = por %p180, %p181
    %p183 = scmp.ne.s32.totalorder %s171, %s172
    %p184 = scmp.eq.s32.totalorder %s22, 1
    %p185 = por %p183, %p184
    %p187 = scmp.ne.s32.totalorder %s172, %s186
    %p188 = scmp.eq.s32.totalorder %s22, 0
    %p189 = por %p187, %p188
    %s191 = sadd.s32 %s190, 1
    %p194 = scmp.eq.s32.totalorder %s16, 1
    %p195 = scmp.ne.s32.totalorder %s190, %s192
    %p196 = scmp.eq.s32.totalorder %s16, 0
    %p197 = por %p195, %p196
    %p198 = scmp.ne.s32.totalorder %s190, %s192
    %p199 = scmp.eq.s32.totalorder %s21, 1
    %p200 = por %p198, %p199
    %p201 = scmp.ne.s32.totalorder %s192, %s193
    %p202 = scmp.eq.s32.totalorder %s21, 0
    %p203 = por %p201, %p202
    %p204 = scmp.ne.s32.totalorder %s192, %s193
    %p205 = scmp.eq.s32.totalorder %s22, 1
    %p206 = por %p204, %p205
    %p208 = scmp.ne.s32.totalorder %s193, %s207
    %p209 = scmp.eq.s32.totalorder %s22, 0
    %p210 = por %p208, %p209
    %s212 = sadd.s32 %s211, 1
    %p215 = scmp.eq.s32.totalorder %s16, 1
    %p216 = scmp.ne.s32.totalorder %s211, %s213
    %p217 = scmp.eq.s32.totalorder %s16, 0
    %p218 = por %p216, %p217
    %p219 = scmp.ne.s32.totalorder %s211, %s213
    %p220 = scmp.eq.s32.totalorder %s21, 1
    %p221 = por %p219, %p220
    %p222 = scmp.ne.s32.totalorder %s213, %s214
    %p223 = scmp.eq.s32.totalorder %s21, 0
    %p224 = por %p222, %p223
    %p225 = scmp.ne.s32.totalorder %s213, %s214
    %p226 = scmp.eq.s32.totalorder %s22, 1
    %p227 = por %p225, %p226
    %p229 = scmp.ne.s32.totalorder %s214, %s228
    %p230 = scmp.eq.s32.totalorder %s22, 0
    %p231 = por %p229, %p230
    %s232 = ssub.s32 %s23, %s35
    %s233 = ssub.s32 %s24, %s31
    %s234 = sor.u32 %s232, %s233
    %p235 = scmp.eq.s32.totalorder %s234, 0
    %s237 = sadd.s32 %s236, 1
    %s238 = scalar_select %p235, %s236, %s237
    %p241 = pneg %p235
    %p242 = scmp.eq.s32.totalorder %s16, 1
    %p243 = por %p241, %p242
    %p244 = scmp.ne.s32.totalorder %s236, %s239
    %p245 = scmp.eq.s32.totalorder %s16, 0
    %p246 = por %p244, %p245
    %p247 = scmp.ne.s32.totalorder %s236, %s239
    %p248 = scmp.eq.s32.totalorder %s21, 1
    %p249 = por %p247, %p248
    %p250 = scmp.ne.s32.totalorder %s239, %s240
    %p251 = scmp.eq.s32.totalorder %s21, 0
    %p252 = por %p250, %p251
    %p253 = scmp.ne.s32.totalorder %s239, %s240
    %p254 = scmp.eq.s32.totalorder %s22, 1
    %p255 = por %p253, %p254
    %p257 = scmp.ne.s32.totalorder %s240, %s256
    %p258 = scmp.eq.s32.totalorder %s22, 0
    %p259 = por %p257, %p258
    %s260 = ssub.s32 %s23, %s35
    %s261 = ssub.s32 %s24, %s31
    %s262 = sor.u32 %s260, %s261
    %p263 = scmp.eq.s32.totalorder %s262, 0
    %s265 = sadd.s32 %s264, 1
    %s266 = scalar_select %p263, %s264, %s265
    %p269 = pneg %p263
    %p270 = scmp.eq.s32.totalorder %s16, 1
    %p271 = por %p269, %p270
    %p272 = scmp.ne.s32.totalorder %s264, %s267
    %p273 = scmp.eq.s32.totalorder %s16, 0
    %p274 = por %p272, %p273
    %p275 = scmp.ne.s32.totalorder %s264, %s267
    %p276 = scmp.eq.s32.totalorder %s21, 1
    %p277 = por %p275, %p276
    %p278 = scmp.ne.s32.totalorder %s267, %s268
    %p279 = scmp.eq.s32.totalorder %s21, 0
    %p280 = por %p278, %p279
    %p281 = scmp.ne.s32.totalorder %s267, %s268
    %p282 = scmp.eq.s32.totalorder %s22, 1
    %p283 = por %p281, %p282
    %p285 = scmp.ne.s32.totalorder %s268, %s284
    %p286 = scmp.eq.s32.totalorder %s22, 0
    %p287 = por %p285, %p286
    %p288 = scmp.le.s32.totalorder 1, %s16
    %p289 = scmp.lt.s32.totalorder %s16, 3
    %p290 = pnand %p288, %p289
    %p291 = pneg %p290
    // Predicated region
    $region9: #{tpu_custom_call.1} parent=5 // pred_check
      _
    $region10: #{tpu_custom_call.1} parent=5 // pred_check_branch
      %293 = sbr.rel (%p290) target = $region12
    $region11: #{tpu_custom_call.1} parent=5 // pred_region
      %s294 = ssub.s32 %s16, 1
      // Predicated region
      $region13: #{tpu_custom_call.1} parent=11 // pred_check
        %p295 = pneg %p77
      $region14: #{tpu_custom_call.1} parent=11 // pred_check_branch
        %297 = sbr.rel (%p295) target = $region16
      $region15: #{tpu_custom_call.1} parent=11 // pred_region
        _
      $region16: #{tpu_custom_call.1} parent=11 // pred_fallthru
        _
      // Predicated region
      $region17: #{tpu_custom_call.1} parent=11 // pred_check
        %p298 = pneg %p98
      $region18: #{tpu_custom_call.1} parent=11 // pred_check_branch
        %300 = sbr.rel (%p298) target = $region20
      $region19: #{tpu_custom_call.1} parent=11 // pred_region
        _
      $region20: #{tpu_custom_call.1} parent=11 // pred_fallthru
        _
      // Predicated region
      $region21: #{tpu_custom_call.1} parent=11 // pred_check
        %p301 = pneg %p119
      $region22: #{tpu_custom_call.1} parent=11 // pred_check_branch
        %303 = sbr.rel (%p301) target = $region24
      $region23: #{tpu_custom_call.1} parent=11 // pred_region
        _
      $region24: #{tpu_custom_call.1} parent=11 // pred_fallthru
        _
      // Predicated region
      $region25: #{tpu_custom_call.1} parent=11 // pred_check
        %p304 = pneg %p140
      $region26: #{tpu_custom_call.1} parent=11 // pred_check_branch
        %306 = sbr.rel (%p304) target = $region28
      $region27: #{tpu_custom_call.1} parent=11 // pred_region
        _
      $region28: #{tpu_custom_call.1} parent=11 // pred_fallthru
        _
      // Predicated region
      $region29: #{tpu_custom_call.1} parent=11 // pred_check
        %p307 = pneg %p161
      $region30: #{tpu_custom_call.1} parent=11 // pred_check_branch
        %309 = sbr.rel (%p307) target = $region32
      $region31: #{tpu_custom_call.1} parent=11 // pred_region
        _
      $region32: #{tpu_custom_call.1} parent=11 // pred_fallthru
        _
      // Predicated region
      $region33: #{tpu_custom_call.1} parent=11 // pred_check
        %p310 = pneg %p182
      $region34: #{tpu_custom_call.1} parent=11 // pred_check_branch
        %312 = sbr.rel (%p310) target = $region36
      $region35: #{tpu_custom_call.1} parent=11 // pred_region
        _
      $region36: #{tpu_custom_call.1} parent=11 // pred_fallthru
        _
      // Predicated region
      $region37: #{tpu_custom_call.1} parent=11 // pred_check
        %p313 = pneg %p203
      $region38: #{tpu_custom_call.1} parent=11 // pred_check_branch
        %315 = sbr.rel (%p313) target = $region40
      $region39: #{tpu_custom_call.1} parent=11 // pred_region
        _
      $region40: #{tpu_custom_call.1} parent=11 // pred_fallthru
        _
      // Predicated region
      $region41: #{tpu_custom_call.1} parent=11 // pred_check
        %p316 = pneg %p224
      $region42: #{tpu_custom_call.1} parent=11 // pred_check_branch
        %318 = sbr.rel (%p316) target = $region44
      $region43: #{tpu_custom_call.1} parent=11 // pred_region
        _
      $region44: #{tpu_custom_call.1} parent=11 // pred_fallthru
        _
    $region12: #{tpu_custom_call.1} parent=5 // pred_fallthru
      _
    %p319 = scmp.lt.s32.totalorder %s16, 2
    // Predicated region
    $region45: #{tpu_custom_call.1} parent=5 // pred_check
      %p320 = pneg %p319
    $region46: #{tpu_custom_call.1} parent=5 // pred_check_branch
      %322 = sbr.rel (%p320) target = $region48
    $region47: #{tpu_custom_call.1} parent=5 // pred_region
      // Predicated region
      $region49: #{tpu_custom_call.1} parent=47 // pred_check
        %p323 = pneg %p50
      $region50: #{tpu_custom_call.1} parent=47 // pred_check_branch
        %325 = sbr.rel (%p323) target = $region52
      $region51: #{tpu_custom_call.1} parent=47 // pred_region
        %s326 = smul.u32 2, %s24
        %p327 = scmp.lt.s32.totalorder %s23, 1
        %s328 = scalar_select %p327, %s23, 1
        %p329 = scmp.lt.s32.totalorder %s326, 1
        %s330 = scalar_select %p329, %s326, 1
        %s331 = smul.addr %s328, 2
        %s332 = sadd.s32 %s330, %s331
        %s333 = smul.addr %s332, 4
        %s334 = scalar_lea.vmem %s0, %s333
        %s335 = smul.u32 2, %s24
      $region52: #{tpu_custom_call.1} parent=47 // pred_fallthru
        _
      // Predicated region
      $region53: #{tpu_custom_call.1} parent=47 // pred_check
        %p336 = pneg %p246
      $region54: #{tpu_custom_call.1} parent=47 // pred_check_branch
        %338 = sbr.rel (%p336) target = $region56
      $region55: #{tpu_custom_call.1} parent=47 // pred_region
        %s339 = smul.u32 2, %s24
        %p340 = scmp.lt.s32.totalorder %s23, 1
        %s341 = scalar_select %p340, %s23, 1
        %p342 = scmp.lt.s32.totalorder %s339, 1
        %s343 = scalar_select %p342, %s339, 1
        %s344 = smul.addr %s341, 2
        %s345 = sadd.s32 %s343, %s344
        %s346 = smul.addr %s345, 4
        %s347 = scalar_lea.vmem %s9, %s346
        %s348 = smul.u32 2, %s24
      $region56: #{tpu_custom_call.1} parent=47 // pred_fallthru
        _
    $region48: #{tpu_custom_call.1} parent=5 // pred_fallthru
      _
    %p349 = scmp.le.s32.totalorder 1, %s16
    %p350 = scmp.lt.s32.totalorder %s16, 3
    %p351 = pnand %p349, %p350
    %p352 = pneg %p351
    // Predicated region
    $region57: #{tpu_custom_call.1} parent=5 // pred_check
      _
    $region58: #{tpu_custom_call.1} parent=5 // pred_check_branch
      %354 = sbr.rel (%p351) target = $region60
    $region59: #{tpu_custom_call.1} parent=5 // pred_region
      %s355 = ssub.s32 %s16, 1
      %s356 = smul.u32 2, %s26
      %p357 = scmp.lt.s32.totalorder %s25, 1
      %s358 = scalar_select %p357, %s25, 1
      %p359 = scmp.lt.s32.totalorder %s356, 1
      %s360 = scalar_select %p359, %s356, 1
      %s361 = smul.addr %s358, 2
      %s362 = sadd.s32 %s360, %s361
      %s363 = smul.addr %s362, 4
      %s364 = scalar_lea.vmem %s0, %s363
      %p365 = pneg %p56
      %p366 = pneg %p53
      %p367 = pneg %p77
      %p368 = pneg %p74
      %p369 = pneg %p98
      %p370 = pneg %p95
      %p371 = pneg %p119
      %p372 = pneg %p116
      %p373 = pneg %p140
      %p374 = pneg %p137
      %p375 = pneg %p161
      %p376 = pneg %p158
      %p377 = pneg %p182
      %p378 = pneg %p179
      %p379 = pneg %p203
      %p380 = pneg %p200
      %p381 = pneg %p224
      %p382 = pneg %p221
      %s383 = smul.u32 2, %s26
      %p384 = scmp.lt.s32.totalorder %s25, 1
      %s385 = scalar_select %p384, %s25, 1
      %p386 = scmp.lt.s32.totalorder %s383, 1
      %s387 = scalar_select %p386, %s383, 1
      %s388 = smul.addr %s385, 2
      %s389 = sadd.s32 %s387, %s388
      %s390 = smul.addr %s389, 4
      %s391 = scalar_lea.vmem %s9, %s390
      %p392 = pneg %p252
      %p393 = pneg %p249
      %p394 = pneg %p280
      %p395 = pneg %p277
      %s396 = smul.u32 2, %s26
      %p397 = scmp.lt.s32.totalorder %s25, 1
      %s398 = scalar_select %p397, %s25, 1
      %p399 = scmp.lt.s32.totalorder %s396, 1
      %s400 = scalar_select %p399, %s396, 1
      %s401 = smul.addr %s398, 2
      %s402 = sadd.s32 %s400, %s401
      %s403 = smul.addr %s402, 4
      %s404 = scalar_lea.vmem %s10, %s403
      %s405 = smul.u32 2, %s26
      %p406 = scmp.lt.s32.totalorder %s25, 1
      %s407 = scalar_select %p406, %s25, 1
      %p408 = scmp.lt.s32.totalorder %s405, 1
      %s409 = scalar_select %p408, %s405, 1
      %s410 = smul.addr %s407, 2
      %s411 = sadd.s32 %s409, %s410
      %s412 = smul.addr %s411, 4
      %s413 = scalar_lea.vmem %s0, %s412
      %s414 = smul.u32 2, %s26
      %s415 = smul.u32 2, %s26
      %p416 = scmp.lt.s32.totalorder %s25, 1
      %s417 = scalar_select %p416, %s25, 1
      %p418 = scmp.lt.s32.totalorder %s415, 1
      %s419 = scalar_select %p418, %s415, 1
      %s420 = smul.addr %s417, 2
      %s421 = sadd.s32 %s419, %s420
      %s422 = smul.addr %s421, 4
      %s423 = scalar_lea.vmem %s9, %s422
      %s424 = smul.u32 2, %s26
      %s425 = smul.u32 2, %s26
      %p426 = scmp.lt.s32.totalorder %s25, 1
      %s427 = scalar_select %p426, %s25, 1
      %p428 = scmp.lt.s32.totalorder %s425, 1
      %s429 = scalar_select %p428, %s425, 1
      %s430 = smul.addr %s427, 2
      %s431 = sadd.s32 %s429, %s430
      %s432 = smul.addr %s431, 4
      %s433 = scalar_lea.vmem %s10, %s432
      %s434 = smul.u32 2, %s26
      %v436 = vld [vmem:[%s413] sm:$0xff]
      %v437 = vld [vmem:[%s1] sm:$0xf]
      %v438 = vld [vmem:[%s1 + $0x4] sm:$0xf]
      %v439 = vld [vmem:[%s1 + $0x8] sm:$0xf]
      %v440 = vld [vmem:[%s1 + $0xc] sm:$0xf]
      %v441 = vld [vmem:[%s2] sm:$0xff]
      %v442 = vld [vmem:[%s2 + $0x8] sm:$0xff]
      %v443 = vld [vmem:[%s2 + $0x10] sm:$0xff]
      %v444 = vld [vmem:[%s2 + $0x18] sm:$0xff]
      %v446 = vcombine.high %v436, %v436
      %v448 = vpack.c.bf16 %v436, %v436
      %v449 = vpack.c.bf16 %v446, %v446
      %451 = vset.pattern.permute.xlu0 0
      %452 = vperm.xlu0 %451, %v441
      %v453 = vpop.permute.xlu0 %452
      %456 = vset.pattern.permute.xlu0 0
      %457 = vperm.xlu0 %456, %v442
      %v458 = vpop.permute.xlu0 %457
      %461 = vset.pattern.permute.xlu0 0
      %462 = vperm.xlu0 %461, %v443
      %v463 = vpop.permute.xlu0 %462
      %466 = vset.pattern.permute.xlu0 0
      %467 = vperm.xlu0 %466, %v444
      %v468 = vpop.permute.xlu0 %467
      %v474 = vunpack.c.l.b16 %v437
      %v475 = vunpack.c.l.b16 %v438
      %v476 = vunpack.c.l.b16 %v439
      %v477 = vunpack.c.l.b16 %v440
      %v478 = vpack.c.b16 %v475, %v474
      %v479 = vpack.c.b16 %v477, %v476
      %vm480 = vcmask 31744
      %v482 = vsel %vm480, %v478, 0
      %v485 = vsel %vm480, %v479, 0
      %vm487 = vcmask 1041408
      %v489 = vsel %vm487, %v448, 0
      %v492 = vsel %vm487, %v449, 0
      %494 = vmatprep.subr.bf16.mxu0 0
      %495 = vmatpush1.bf16.msra.mxu0 0
      %496 = vmatprep.subr.bf16.mxu0 0
      %497 = vmatpush1.bf16.msra.mxu0 0
      %498 = vmatprep.subr.bf16.mxu0 0
      %499 = vmatpush1.bf16.msra.mxu0 0
      %500 = vmatprep.subr.bf16.mxu0 0
      %501 = vmatpush1.bf16.msra.mxu0 0
      %502 = vmatprep.subr.bf16.mxu0 0
      %503 = vmatpush1.bf16.msra.mxu0 0
      %504 = vmatprep.subr.bf16.mxu0 0
      %505 = vmatpush1.bf16.msra.mxu0 0
      %506 = vmatprep.subr.bf16.mxu0 0
      %507 = vmatpush1.bf16.msra.mxu0 0
      %508 = vmatprep.subr.bf16.mxu0 %v492
      %509 = vmatpush1.bf16.msra.mxu0 %v489
      %510 = vmatprep.subr.bf16.mxu0 0
      %511 = vmatpush2.bf16.msra.mxu0 0
      %512 = vmatprep.subr.bf16.mxu0 0
      %513 = vmatpush2.bf16.msra.mxu0 0
      %514 = vmatprep.subr.bf16.mxu0 0
      %515 = vmatpush2.bf16.msra.mxu0 0
      %516 = vmatprep.subr.bf16.mxu0 0
      %517 = vmatpush2.bf16.msra.mxu0 0
      %518 = vmatprep.subr.bf16.mxu0 0
      %519 = vmatpush2.bf16.msra.mxu0 0
      %520 = vmatprep.subr.bf16.mxu0 0
      %521 = vmatpush2.bf16.msra.mxu0 0
      %522 = vmatprep.subr.bf16.mxu0 0
      %523 = vmatpush2.bf16.msra.mxu0 0
      %524 = vmatprep.subr.bf16.mxu0 0
      %525 = vmatpush2.bf16.msra.mxu0 0
      %526 = vmatprep.mubr.bf16.mxu0 0
      %527 = vmatmul.mubr.bf16.gmra.mxu0 %v482
      %v528 = vpop.f32.mrf.mxu0
      %v529 = vadd.f32 %v453, %v528
      %v530 = vpop.f32.mrf.mxu0
      %v531 = vadd.f32 %v453, %v530
      %v532 = vpop.f32.mrf.mxu0
      %v533 = vadd.f32 %v458, %v532
      %v534 = vpop.f32.mrf.mxu0
      %v535 = vadd.f32 %v458, %v534
      %536 = vmatprep.mubr.bf16.mxu0 0
      %537 = vmatmul.mubr.bf16.gmra.mxu0 %v485
      %v538 = vpop.f32.mrf.mxu0
      %v539 = vadd.f32 %v463, %v538
      %v540 = vpop.f32.mrf.mxu0
      %v541 = vadd.f32 %v463, %v540
      %v542 = vpop.f32.mrf.mxu0
      %v543 = vadd.f32 %v468, %v542
      %v544 = vpop.f32.mrf.mxu0
      %v545 = vadd.f32 %v468, %v544
      %546 = vdwg.mxu0
      %v547 = vmax.f32 %v529, 0.0
      %v548 = vmax.f32 %v531, 0.0
      %v549 = vmax.f32 %v533, 0.0
      %v550 = vmax.f32 %v535, 0.0
      %v551 = vmax.f32 %v539, 0.0
      %v552 = vmax.f32 %v541, 0.0
      %v553 = vmax.f32 %v543, 0.0
      %v554 = vmax.f32 %v545, 0.0
      %v555 = vld [vmem:[%s3] sm:$0xf]
      %v556 = vld [vmem:[%s3 + $0x4] sm:$0xf]
      %v557 = vld [vmem:[%s3 + $0x8] sm:$0xf]
      %v558 = vld [vmem:[%s3 + $0xc] sm:$0xf]
      %v559 = vld [vmem:[%s4] sm:$0xff]
      %v560 = vld [vmem:[%s4 + $0x8] sm:$0xff]
      %v561 = vld [vmem:[%s4 + $0x10] sm:$0xff]
      %v562 = vld [vmem:[%s4 + $0x18] sm:$0xff]
      %v563 = vpack.c.bf16 %v549, %v547
      %v564 = vpack.c.bf16 %v550, %v548
      %v565 = vpack.c.bf16 %v553, %v551
      %v566 = vpack.c.bf16 %v554, %v552
      %568 = vset.pattern.permute.xlu0 0
      %569 = vperm.xlu0 %568, %v559
      %v570 = vpop.permute.xlu0 %569
      %573 = vset.pattern.permute.xlu0 0
      %574 = vperm.xlu0 %573, %v560
      %v575 = vpop.permute.xlu0 %574
      %578 = vset.pattern.permute.xlu0 0
      %579 = vperm.xlu0 %578, %v561
      %v580 = vpop.permute.xlu0 %579
      %583 = vset.pattern.permute.xlu0 0
      %584 = vperm.xlu0 %583, %v562
      %v585 = vpop.permute.xlu0 %584
      %v591 = vunpack.c.l.b16 %v555
      %v592 = vunpack.c.l.b16 %v556
      %v593 = vunpack.c.l.b16 %v557
      %v594 = vunpack.c.l.b16 %v558
      %v595 = vpack.c.b16 %v592, %v591
      %v596 = vpack.c.b16 %v594, %v593
      %vm597 = vcmask 261120
      %v599 = vsel %vm597, %v595, 0
      %v602 = vsel %vm597, %v596, 0
      %604 = vmatprep.subr.bf16.mxu0 0
      %605 = vmatpush1.bf16.msra.mxu0 0
      %606 = vmatprep.subr.bf16.mxu0 0
      %607 = vmatpush1.bf16.msra.mxu0 0
      %608 = vmatprep.subr.bf16.mxu0 0
      %609 = vmatpush1.bf16.msra.mxu0 0
      %610 = vmatprep.subr.bf16.mxu0 0
      %611 = vmatpush1.bf16.msra.mxu0 0
      %612 = vmatprep.subr.bf16.mxu0 0
      %613 = vmatpush1.bf16.msra.mxu0 0
      %614 = vmatprep.subr.bf16.mxu0 0
      %615 = vmatpush1.bf16.msra.mxu0 0
      %616 = vmatprep.subr.bf16.mxu0 %v566
      %617 = vmatpush1.bf16.msra.mxu0 %v565
      %618 = vmatprep.subr.bf16.mxu0 %v564
      %619 = vmatpush1.bf16.msra.mxu0 %v563
      %620 = vmatprep.subr.bf16.mxu0 0
      %621 = vmatpush2.bf16.msra.mxu0 0
      %622 = vmatprep.subr.bf16.mxu0 0
      %623 = vmatpush2.bf16.msra.mxu0 0
      %624 = vmatprep.subr.bf16.mxu0 0
      %625 = vmatpush2.bf16.msra.mxu0 0
      %626 = vmatprep.subr.bf16.mxu0 0
      %627 = vmatpush2.bf16.msra.mxu0 0
      %628 = vmatprep.subr.bf16.mxu0 0
      %629 = vmatpush2.bf16.msra.mxu0 0
      %630 = vmatprep.subr.bf16.mxu0 0
      %631 = vmatpush2.bf16.msra.mxu0 0
      %632 = vmatprep.subr.bf16.mxu0 0
      %633 = vmatpush2.bf16.msra.mxu0 0
      %634 = vmatprep.subr.bf16.mxu0 0
      %635 = vmatpush2.bf16.msra.mxu0 0
      %636 = vmatprep.mubr.bf16.mxu0 0
      %637 = vmatmul.mubr.bf16.gmra.mxu0 %v599
      %v638 = vpop.f32.mrf.mxu0
      %v639 = vadd.f32 %v570, %v638
      %v640 = vpop.f32.mrf.mxu0
      %v641 = vadd.f32 %v570, %v640
      %v642 = vpop.f32.mrf.mxu0
      %v643 = vadd.f32 %v575, %v642
      %v644 = vpop.f32.mrf.mxu0
      %v645 = vadd.f32 %v575, %v644
      %646 = vmatprep.mubr.bf16.mxu0 0
      %647 = vmatmul.mubr.bf16.gmra.mxu0 %v602
      %v648 = vpop.f32.mrf.mxu0
      %v649 = vadd.f32 %v580, %v648
      %v650 = vpop.f32.mrf.mxu0
      %v651 = vadd.f32 %v580, %v650
      %v652 = vpop.f32.mrf.mxu0
      %v653 = vadd.f32 %v585, %v652
      %v654 = vpop.f32.mrf.mxu0
      %v655 = vadd.f32 %v585, %v654
      %656 = vdwg.mxu0
      %v657 = vmax.f32 %v639, 0.0
      %v658 = vmax.f32 %v641, 0.0
      %v659 = vmax.f32 %v643, 0.0
      %v660 = vmax.f32 %v645, 0.0
      %v661 = vmax.f32 %v649, 0.0
      %v662 = vmax.f32 %v651, 0.0
      %v663 = vmax.f32 %v653, 0.0
      %v664 = vmax.f32 %v655, 0.0
      %v665 = vld [vmem:[%s5] sm:$0xf]
      %v666 = vld [vmem:[%s5 + $0x4] sm:$0xf]
      %v667 = vld [vmem:[%s5 + $0x8] sm:$0xf]
      %v668 = vld [vmem:[%s5 + $0xc] sm:$0xf]
      %v669 = vld [vmem:[%s6] sm:$0xff]
      %v670 = vld [vmem:[%s6 + $0x8] sm:$0xff]
      %v671 = vld [vmem:[%s6 + $0x10] sm:$0xff]
      %v672 = vld [vmem:[%s6 + $0x18] sm:$0xff]
      %v673 = vpack.c.bf16 %v659, %v657
      %v674 = vpack.c.bf16 %v660, %v658
      %v675 = vpack.c.bf16 %v663, %v661
      %v676 = vpack.c.bf16 %v664, %v662
      %678 = vset.pattern.permute.xlu0 0
      %679 = vperm.xlu0 %678, %v669
      %v680 = vpop.permute.xlu0 %679
      %683 = vset.pattern.permute.xlu0 0
      %684 = vperm.xlu0 %683, %v670
      %v685 = vpop.permute.xlu0 %684
      %688 = vset.pattern.permute.xlu0 0
      %689 = vperm.xlu0 %688, %v671
      %v690 = vpop.permute.xlu0 %689
      %693 = vset.pattern.permute.xlu0 0
      %694 = vperm.xlu0 %693, %v672
      %v695 = vpop.permute.xlu0 %694
      %v701 = vunpack.c.l.b16 %v665
      %v702 = vunpack.c.l.b16 %v666
      %v703 = vunpack.c.l.b16 %v667
      %v704 = vunpack.c.l.b16 %v668
      %v705 = vpack.c.b16 %v702, %v701
      %v706 = vpack.c.b16 %v704, %v703
      %v708 = vsel %vm597, %v705, 0
      %v711 = vsel %vm597, %v706, 0
      %713 = vmatprep.subr.bf16.mxu0 0
      %714 = vmatpush1.bf16.msra.mxu0 0
      %715 = vmatprep.subr.bf16.mxu0 0
      %716 = vmatpush1.bf16.msra.mxu0 0
      %717 = vmatprep.subr.bf16.mxu0 0
      %718 = vmatpush1.bf16.msra.mxu0 0
      %719 = vmatprep.subr.bf16.mxu0 0
      %720 = vmatpush1.bf16.msra.mxu0 0
      %721 = vmatprep.subr.bf16.mxu0 0
      %722 = vmatpush1.bf16.msra.mxu0 0
      %723 = vmatprep.subr.bf16.mxu0 0
      %724 = vmatpush1.bf16.msra.mxu0 0
      %725 = vmatprep.subr.bf16.mxu0 %v676
      %726 = vmatpush1.bf16.msra.mxu0 %v675
      %727 = vmatprep.subr.bf16.mxu0 %v674
      %728 = vmatpush1.bf16.msra.mxu0 %v673
      %729 = vmatprep.subr.bf16.mxu0 0
      %730 = vmatpush2.bf16.msra.mxu0 0
      %731 = vmatprep.subr.bf16.mxu0 0
      %732 = vmatpush2.bf16.msra.mxu0 0
      %733 = vmatprep.subr.bf16.mxu0 0
      %734 = vmatpush2.bf16.msra.mxu0 0
      %735 = vmatprep.subr.bf16.mxu0 0
      %736 = vmatpush2.bf16.msra.mxu0 0
      %737 = vmatprep.subr.bf16.mxu0 0
      %738 = vmatpush2.bf16.msra.mxu0 0
      %739 = vmatprep.subr.bf16.mxu0 0
      %740 = vmatpush2.bf16.msra.mxu0 0
      %741 = vmatprep.subr.bf16.mxu0 0
      %742 = vmatpush2.bf16.msra.mxu0 0
      %743 = vmatprep.subr.bf16.mxu0 0
      %744 = vmatpush2.bf16.msra.mxu0 0
      %745 = vmatprep.mubr.bf16.mxu0 0
      %746 = vmatmul.mubr.bf16.gmra.mxu0 %v708
      %v747 = vpop.f32.mrf.mxu0
      %v748 = vadd.f32 %v680, %v747
      %v749 = vpop.f32.mrf.mxu0
      %v750 = vadd.f32 %v680, %v749
      %v751 = vpop.f32.mrf.mxu0
      %v752 = vadd.f32 %v685, %v751
      %v753 = vpop.f32.mrf.mxu0
      %v754 = vadd.f32 %v685, %v753
      %755 = vmatprep.mubr.bf16.mxu0 0
      %756 = vmatmul.mubr.bf16.gmra.mxu0 %v711
      %v757 = vpop.f32.mrf.mxu0
      %v758 = vadd.f32 %v690, %v757
      %v759 = vpop.f32.mrf.mxu0
      %v760 = vadd.f32 %v690, %v759
      %v761 = vpop.f32.mrf.mxu0
      %v762 = vadd.f32 %v695, %v761
      %v763 = vpop.f32.mrf.mxu0
      %v764 = vadd.f32 %v695, %v763
      %765 = vdwg.mxu0
      %v766 = vmax.f32 %v748, 0.0
      %v767 = vmax.f32 %v750, 0.0
      %v768 = vmax.f32 %v752, 0.0
      %v769 = vmax.f32 %v754, 0.0
      %v770 = vmax.f32 %v758, 0.0
      %v771 = vmax.f32 %v760, 0.0
      %v772 = vmax.f32 %v762, 0.0
      %v773 = vmax.f32 %v764, 0.0
      %v774 = vld [vmem:[%s7] sm:$0x3]
      %v775 = vld [vmem:[%s8] sm:$0x7]
      %v776 = vpack.c.bf16 %v768, %v766
      %v777 = vpack.c.bf16 %v769, %v767
      %v778 = vpack.c.bf16 %v772, %v770
      %v779 = vpack.c.bf16 %v773, %v771
      %781 = vset.pattern.permute.xlu0 0
      %782 = vperm.xlu0 %781, %v775
      %v783 = vpop.permute.xlu0 %782
      %v786 = vsel %vm597, %v774, 0
      %788 = vmatprep.subr.bf16.mxu0 0
      %789 = vmatpush1.bf16.msra.mxu0 0
      %790 = vmatprep.subr.bf16.mxu0 0
      %791 = vmatpush1.bf16.msra.mxu0 0
      %792 = vmatprep.subr.bf16.mxu0 0
      %793 = vmatpush1.bf16.msra.mxu0 0
      %794 = vmatprep.subr.bf16.mxu0 0
      %795 = vmatpush1.bf16.msra.mxu0 0
      %796 = vmatprep.subr.bf16.mxu0 0
      %797 = vmatpush1.bf16.msra.mxu0 0
      %798 = vmatprep.subr.bf16.mxu0 0
      %799 = vmatpush1.bf16.msra.mxu0 0
      %800 = vmatprep.subr.bf16.mxu0 %v779
      %801 = vmatpush1.bf16.msra.mxu0 %v778
      %802 = vmatprep.subr.bf16.mxu0 %v777
      %803 = vmatpush1.bf16.msra.mxu0 %v776
      %804 = vmatprep.subr.bf16.mxu0 0
      %805 = vmatpush2.bf16.msra.mxu0 0
      %806 = vmatprep.subr.bf16.mxu0 0
      %807 = vmatpush2.bf16.msra.mxu0 0
      %808 = vmatprep.subr.bf16.mxu0 0
      %809 = vmatpush2.bf16.msra.mxu0 0
      %810 = vmatprep.subr.bf16.mxu0 0
      %811 = vmatpush2.bf16.msra.mxu0 0
      %812 = vmatprep.subr.bf16.mxu0 0
      %813 = vmatpush2.bf16.msra.mxu0 0
      %814 = vmatprep.subr.bf16.mxu0 0
      %815 = vmatpush2.bf16.msra.mxu0 0
      %816 = vmatprep.subr.bf16.mxu0 0
      %817 = vmatpush2.bf16.msra.mxu0 0
      %818 = vmatprep.subr.bf16.mxu0 0
      %819 = vmatpush2.bf16.msra.mxu0 0
      %820 = vmatprep.mubr.bf16.mxu0 0
      %821 = vmatmul.mubr.bf16.gmra.mxu0 %v786
      %v822 = vpop.f32.mrf.mxu0
      %v823 = vadd.f32 %v783, %v822
      %v824 = vpop.f32.mrf.mxu0
      %v825 = vadd.f32 %v783, %v824
      %v826 = vpop.f32.mrf.mxu0
      %v827 = vpop.f32.mrf.mxu0
      %828 = vdwg.mxu0
      %v829 = vtanh.pop %v823
      %v830 = vtanh.pop %v825
      %v831 = vld [vmem:[%s423] sm:$0x77]
      %v833 = vcombine.high %v831, %v831
      %v835 = vadd.f32 %v829, %v831
      %v836 = vadd.f32 %v830, %v833
      %v839 = vcombine.low %v835, %v836
      %841 = vst [vmem:[%s433] sm:$0x77] %v839
      %s842 = smul.u32 2, %s26
      %p843 = scmp.lt.s32.totalorder %s25, 1
      %s844 = scalar_select %p843, %s25, 1
      %p845 = scmp.lt.s32.totalorder %s842, 1
      %s846 = scalar_select %p845, %s842, 1
      %s847 = smul.addr %s844, 2
      %s848 = sadd.s32 %s846, %s847
      %s849 = smul.addr %s848, 4
      %s850 = scalar_lea.vmem %s10, %s849
      // Predicated region
      $region61: #{tpu_custom_call.1} parent=59 // pred_check
        %p851 = pneg %p277
      $region62: #{tpu_custom_call.1} parent=59 // pred_check_branch
        %853 = sbr.rel (%p851) target = $region64
      $region63: #{tpu_custom_call.1} parent=59 // pred_region
        %s854 = smul.u32 2, %s26
      $region64: #{tpu_custom_call.1} parent=59 // pred_fallthru
        _
    $region60: #{tpu_custom_call.1} parent=5 // pred_fallthru
      _
    %p855 = scmp.le.s32.totalorder 2, %s16
    // Predicated region
    $region65: #{tpu_custom_call.1} parent=5 // pred_check
      %p856 = pneg %p855
    $region66: #{tpu_custom_call.1} parent=5 // pred_check_branch
      %858 = sbr.rel (%p856) target = $region68
    $region67: #{tpu_custom_call.1} parent=5 // pred_region
      %s859 = ssub.s32 %s16, 2
      // Predicated region
      $region69: #{tpu_custom_call.1} parent=67 // pred_check
        %p860 = pneg %p283
      $region70: #{tpu_custom_call.1} parent=67 // pred_check_branch
        %862 = sbr.rel (%p860) target = $region72
      $region71: #{tpu_custom_call.1} parent=67 // pred_region
        %s863 = smul.u32 2, %s28
        %p864 = scmp.lt.s32.totalorder %s27, 1
        %s865 = scalar_select %p864, %s27, 1
        %p866 = scmp.lt.s32.totalorder %s863, 1
        %s867 = scalar_select %p866, %s863, 1
        %s868 = smul.addr %s865, 2
        %s869 = sadd.s32 %s867, %s868
        %s870 = smul.addr %s869, 4
        %s871 = scalar_lea.vmem %s10, %s870
      $region72: #{tpu_custom_call.1} parent=67 // pred_fallthru
        _
    $region68: #{tpu_custom_call.1} parent=5 // pred_fallthru
      _
  $region6: #{tpu_custom_call.1} parent=0 // loop_footer
    %s20 = sadd.s32 1, %s16
  $region7: #{tpu_custom_call.1} parent=0 // loop_footer_branch
    %15 = sbr.rel target = $region3
  $region8: #{tpu_custom_call.1} parent=0 // loop_exit
    _

</llo_original>
